<compile_context>
chip_gen: v7x
topology: tpu7x:2x2x1
jax: 0.10.0
libtpu: 0.0.40
codegen_flags: <defaults>
</compile_context>

<pallas_src>
import numpy as np
import jax
import jax.numpy as jnp
from jax.experimental import pallas as pl
from jax.experimental.pallas import tpu as pltpu

PAD = 2  # ZeroPad2d(padding=2)


# ----------------------- fused Pallas kernel -----------------------

def fused_kernel(w1_ref, b1_ref, w2_ref, b2_ref, x_ref, o_ref):
    # SMEM: w1_ref (2,3)  folded convT1+BN weight (Cout, Cin)
    #       b1_ref (2,)   folded convT1+BN bias
    #       w2_ref (3,2)  conv2 weight (Cout, Cin)
    #       b2_ref (3,)   conv2 bias
    # VMEM: x_ref (3, Hp, Wp)  padded input planes (border value irrelevant)
    #       o_ref (3, Hp, Wp)  output planes
    Hp, Wp = x_ref.shape[1], x_ref.shape[2]

    # Interior mask of the padded canvas (True where the original pixels live).
    row = jax.lax.broadcasted_iota(jnp.int32, (Hp, Wp), 0)
    col = jax.lax.broadcasted_iota(jnp.int32, (Hp, Wp), 1)
    interior = ((row >= PAD) & (row < Hp - PAD) &
                (col >= PAD) & (col < Wp - PAD))

    x0 = x_ref[0]
    x1 = x_ref[1]
    x2 = x_ref[2]

    # ConvTranspose2d(3->2, k=1, s=1) (+ folded eval-mode BN) + ReLU,
    # forced to zero on the pad border -> exactly ZeroPad2d(relu(bn(convT1(x)))).
    # Unrolled broadcast-FMAs on the VPU.
    h = []
    for co in range(2):
        acc = (w1_ref[co, 0] * x0 + w1_ref[co, 1] * x1 + w1_ref[co, 2] * x2
               + b1_ref[co])
        h.append(jnp.where(interior, jnp.maximum(acc, 0.0), 0.0))

    # Conv2d(2->3, k=1): on the zero border this evaluates to exactly b2[co].
    for co in range(3):
        o_ref[co, :, :] = (w2_ref[co, 0] * h[0] + w2_ref[co, 1] * h[1]
                           + b2_ref[co])


_SMEM = pl.BlockSpec(memory_space=pltpu.MemorySpace.SMEM)


def fused_forward(x_nchw, w1f, b1f, w2, b2):
    N, Cin, H, W = x_nchw.shape
    assert Cin == 3
    Hp, Wp = H + 2 * PAD, W + 2 * PAD
    # Pad the (cheap, 3-channel) input once; only the shape matters — the kernel
    # masks the hidden activations on the border.
    xp = jnp.pad(x_nchw.astype(jnp.float32),
                 ((0, 0), (0, 0), (PAD, PAD), (PAD, PAD)))
    return pl.pallas_call(
        fused_kernel,
        out_shape=jax.ShapeDtypeStruct((N, 3, Hp, Wp), jnp.float32),
        grid=(N,),
        in_specs=[_SMEM, _SMEM, _SMEM, _SMEM,
                  pl.BlockSpec((None, 3, Hp, Wp), lambda n: (n, 0, 0, 0))],
        out_specs=pl.BlockSpec((None, 3, Hp, Wp), lambda n: (n, 0, 0, 0)),
        compiler_params=pltpu.CompilerParams(
            dimension_semantics=("parallel",)),
    )(w1f, b1f, w2, b2, xp)


# ----------------------- params / wrapper / reference -----------------------

def make_params(key):
    k1, k2, k3, k4, k5 = jax.random.split(key, 5)
    # ConvTranspose2d(3, 2, k=1, s=1): per-pixel linear map 3 -> 2.
    # (PyTorch weight layout is (Cin, Cout, 1, 1); stored here as (Cout, Cin).)
    w1 = jax.random.normal(k1, (2, 3), jnp.float32) * 0.5
    b1 = jax.random.normal(k2, (2,), jnp.float32) * 0.1
    # Conv2d(2, 3, k=1): stored as (Cout, Cin) = (3, 2)
    w2 = jax.random.normal(k3, (3, 2), jnp.float32) * 0.5
    b2 = jax.random.normal(k4, (3,), jnp.float32) * 0.1
    # BatchNorm2d(2), eval mode: gamma buffer = 10*rand (bn_weight_change),
    # beta=0, running_mean=0, running_var=1, eps=1e-5.
    gamma = 10.0 * jax.random.uniform(k5, (2,), jnp.float32)
    beta = jnp.zeros((2,), jnp.float32)
    mean = jnp.zeros((2,), jnp.float32)
    var = jnp.ones((2,), jnp.float32)
    eps = 1e-5
    scale = gamma / jnp.sqrt(var + eps)
    # Fold BN affine into convT1:  scale*(W x + b - mean) + beta
    w1f = w1 * scale[:, None]
    b1f = (b1 - mean) * scale + beta
    return dict(w1f=w1f, b1f=b1f, w2=w2, b2=b2,
                w1=w1, b1=b1, gamma=gamma, beta=beta, mean=mean, var=var)


@jax.jit
def forward(x_nchw, params):
    return fused_forward(x_nchw, params["w1f"], params["b1f"],
                         params["w2"], params["b2"])


def reference(x_nchw, params):
    """Pure-JAX NCHW reference mirroring the PyTorch ops (BN NOT folded)."""
    hi = jax.lax.Precision.HIGHEST
    x = x_nchw.astype(jnp.float32)
    h = jnp.einsum("oc,nchw->nohw", params["w1"], x, precision=hi)
    h = h + params["b1"][None, :, None, None]
    scale = params["gamma"] / jnp.sqrt(params["var"] + 1e-5)
    h = (h - params["mean"][None, :, None, None]) * scale[None, :, None, None] \
        + params["beta"][None, :, None, None]
    h = jnp.maximum(h, 0.0)
    hp = jnp.pad(h, ((0, 0), (0, 0), (PAD, PAD), (PAD, PAD)))
    o = jnp.einsum("oc,nchw->nohw", params["w2"], hp, precision=hi)
    o = o + params["b2"][None, :, None, None]
    return o


if __name__ == "__main__":
    key = jax.random.PRNGKey(0)
    kx, kp = jax.random.split(key)
    x = jax.random.normal(kx, (2, 3, 16, 16), jnp.float32)   # NCHW, Cin=3
    params = make_params(kp)

    out = forward(x, params)
    out = jax.block_until_ready(out)
    assert out.shape == (2, 3, 20, 20), out.shape

    ref = reference(x, params)
    np.testing.assert_allclose(np.asarray(out), np.asarray(ref),
                               rtol=1e-4, atol=1e-5)

    print("KERNEL_OK")
</pallas_src>

<mosaic_0001>
module attributes {stable_mosaic.version = 11 : i64} {
  func.func @fused_kernel(%arg0: i32, %arg1: memref<2x3xf32, #tpu.memory_space<smem>>, %arg2: memref<2xf32, #tpu.memory_space<smem>>, %arg3: memref<3x2xf32, #tpu.memory_space<smem>>, %arg4: memref<3xf32, #tpu.memory_space<smem>>, %arg5: memref<1x3x20x20xf32, #tpu.memory_space<vmem>>, %arg6: memref<1x3x20x20xf32, #tpu.memory_space<vmem>>) attributes {dimension_semantics = [#tpu.dimension_semantics<parallel>], iteration_bounds = array<i64: 2>, scalar_prefetch = 0 : i64, scratch_operands = 0 : i64, tpu.core_type = #tpu.core_type<tc>, window_params = [{transform_indices = @transform_0, window_bounds = array<i64: 2, 3>}, {transform_indices = @transform_1, window_bounds = array<i64: 2>}, {transform_indices = @transform_2, window_bounds = array<i64: 3, 2>}, {transform_indices = @transform_3, window_bounds = array<i64: 3>}, {transform_indices = @transform_4, window_bounds = array<i64: 1, 3, 20, 20>}, {transform_indices = @transform_5, window_bounds = array<i64: 1, 3, 20, 20>}]} {
    %0 = tpu.iota {dimensions = array<i32: 0>} : vector<20x20xi32>
    %1 = tpu.iota {dimensions = array<i32: 1>} : vector<20x20xi32>
    %c2_i32 = arith.constant 2 : i32
    %2 = vector.broadcast %c2_i32 : i32 to vector<20x20xi32>
    %3 = arith.cmpi sge, %0, %2 : vector<20x20xi32>
    %c18_i32 = arith.constant 18 : i32
    %4 = vector.broadcast %c18_i32 : i32 to vector<20x20xi32>
    %5 = arith.cmpi slt, %0, %4 : vector<20x20xi32>
    %6 = arith.andi %3, %5 : vector<20x20xi1>
    %c2_i32_0 = arith.constant 2 : i32
    %7 = vector.broadcast %c2_i32_0 : i32 to vector<20x20xi32>
    %8 = arith.cmpi sge, %1, %7 : vector<20x20xi32>
    %9 = arith.andi %6, %8 : vector<20x20xi1>
    %c18_i32_1 = arith.constant 18 : i32
    %10 = vector.broadcast %c18_i32_1 : i32 to vector<20x20xi32>
    %11 = arith.cmpi slt, %1, %10 : vector<20x20xi32>
    %12 = arith.andi %9, %11 : vector<20x20xi1>
    %c0 = arith.constant 0 : index
    %c0_2 = arith.constant 0 : index
    %c0_3 = arith.constant 0 : index
    %c0_4 = arith.constant 0 : index
    %13 = vector.load %arg5[%c0, %c0_2, %c0_3, %c0_4] : memref<1x3x20x20xf32, #tpu.memory_space<vmem>>, vector<1x1x20x20xf32>
    %14 = vector.shape_cast %13 : vector<1x1x20x20xf32> to vector<20x20xf32>
    %c0_5 = arith.constant 0 : index
    %c1 = arith.constant 1 : index
    %c0_6 = arith.constant 0 : index
    %c0_7 = arith.constant 0 : index
    %15 = vector.load %arg5[%c0_5, %c1, %c0_6, %c0_7] : memref<1x3x20x20xf32, #tpu.memory_space<vmem>>, vector<1x1x20x20xf32>
    %16 = vector.shape_cast %15 : vector<1x1x20x20xf32> to vector<20x20xf32>
    %c0_8 = arith.constant 0 : index
    %c2 = arith.constant 2 : index
    %c0_9 = arith.constant 0 : index
    %c0_10 = arith.constant 0 : index
    %17 = vector.load %arg5[%c0_8, %c2, %c0_9, %c0_10] : memref<1x3x20x20xf32, #tpu.memory_space<vmem>>, vector<1x1x20x20xf32>
    %18 = vector.shape_cast %17 : vector<1x1x20x20xf32> to vector<20x20xf32>
    %c0_11 = arith.constant 0 : index
    %c0_12 = arith.constant 0 : index
    %19 = memref.load %arg1[%c0_11, %c0_12] : memref<2x3xf32, #tpu.memory_space<smem>>
    %20 = vector.broadcast %19 : f32 to vector<20x20xf32>
    %21 = arith.mulf %20, %14 : vector<20x20xf32>
    %c0_13 = arith.constant 0 : index
    %c1_14 = arith.constant 1 : index
    %22 = memref.load %arg1[%c0_13, %c1_14] : memref<2x3xf32, #tpu.memory_space<smem>>
    %23 = vector.broadcast %22 : f32 to vector<20x20xf32>
    %24 = arith.mulf %23, %16 : vector<20x20xf32>
    %25 = arith.addf %21, %24 : vector<20x20xf32>
    %c0_15 = arith.constant 0 : index
    %c2_16 = arith.constant 2 : index
    %26 = memref.load %arg1[%c0_15, %c2_16] : memref<2x3xf32, #tpu.memory_space<smem>>
    %27 = vector.broadcast %26 : f32 to vector<20x20xf32>
    %28 = arith.mulf %27, %18 : vector<20x20xf32>
    %29 = arith.addf %25, %28 : vector<20x20xf32>
    %c0_17 = arith.constant 0 : index
    %30 = memref.load %arg2[%c0_17] : memref<2xf32, #tpu.memory_space<smem>>
    %31 = vector.broadcast %30 : f32 to vector<20x20xf32>
    %32 = arith.addf %29, %31 : vector<20x20xf32>
    %cst = arith.constant 0.000000e+00 : f32
    %33 = vector.broadcast %cst : f32 to vector<20x20xf32>
    %34 = arith.maximumf %32, %33 : vector<20x20xf32>
    %cst_18 = arith.constant 0.000000e+00 : f32
    %35 = vector.broadcast %cst_18 : f32 to vector<20x20xf32>
    %36 = arith.select %12, %34, %35 : vector<20x20xi1>, vector<20x20xf32>
    %c1_19 = arith.constant 1 : index
    %c0_20 = arith.constant 0 : index
    %37 = memref.load %arg1[%c1_19, %c0_20] : memref<2x3xf32, #tpu.memory_space<smem>>
    %38 = vector.broadcast %37 : f32 to vector<20x20xf32>
    %39 = arith.mulf %38, %14 : vector<20x20xf32>
    %c1_21 = arith.constant 1 : index
    %c1_22 = arith.constant 1 : index
    %40 = memref.load %arg1[%c1_21, %c1_22] : memref<2x3xf32, #tpu.memory_space<smem>>
    %41 = vector.broadcast %40 : f32 to vector<20x20xf32>
    %42 = arith.mulf %41, %16 : vector<20x20xf32>
    %43 = arith.addf %39, %42 : vector<20x20xf32>
    %c1_23 = arith.constant 1 : index
    %c2_24 = arith.constant 2 : index
    %44 = memref.load %arg1[%c1_23, %c2_24] : memref<2x3xf32, #tpu.memory_space<smem>>
    %45 = vector.broadcast %44 : f32 to vector<20x20xf32>
    %46 = arith.mulf %45, %18 : vector<20x20xf32>
    %47 = arith.addf %43, %46 : vector<20x20xf32>
    %c1_25 = arith.constant 1 : index
    %48 = memref.load %arg2[%c1_25] : memref<2xf32, #tpu.memory_space<smem>>
    %49 = vector.broadcast %48 : f32 to vector<20x20xf32>
    %50 = arith.addf %47, %49 : vector<20x20xf32>
    %cst_26 = arith.constant 0.000000e+00 : f32
    %51 = vector.broadcast %cst_26 : f32 to vector<20x20xf32>
    %52 = arith.maximumf %50, %51 : vector<20x20xf32>
    %cst_27 = arith.constant 0.000000e+00 : f32
    %53 = vector.broadcast %cst_27 : f32 to vector<20x20xf32>
    %54 = arith.select %12, %52, %53 : vector<20x20xi1>, vector<20x20xf32>
    %c0_28 = arith.constant 0 : index
    %c0_29 = arith.constant 0 : index
    %55 = memref.load %arg3[%c0_28, %c0_29] : memref<3x2xf32, #tpu.memory_space<smem>>
    %56 = vector.broadcast %55 : f32 to vector<20x20xf32>
    %57 = arith.mulf %56, %36 : vector<20x20xf32>
    %c0_30 = arith.constant 0 : index
    %c1_31 = arith.constant 1 : index
    %58 = memref.load %arg3[%c0_30, %c1_31] : memref<3x2xf32, #tpu.memory_space<smem>>
    %59 = vector.broadcast %58 : f32 to vector<20x20xf32>
    %60 = arith.mulf %59, %54 : vector<20x20xf32>
    %61 = arith.addf %57, %60 : vector<20x20xf32>
    %c0_32 = arith.constant 0 : index
    %62 = memref.load %arg4[%c0_32] : memref<3xf32, #tpu.memory_space<smem>>
    %63 = vector.broadcast %62 : f32 to vector<20x20xf32>
    %64 = arith.addf %61, %63 : vector<20x20xf32>
    %c0_33 = arith.constant 0 : index
    %c0_34 = arith.constant 0 : index
    %c0_35 = arith.constant 0 : index
    %c0_36 = arith.constant 0 : index
    %65 = vector.load %arg6[%c0_33, %c0_34, %c0_35, %c0_36] : memref<1x3x20x20xf32, #tpu.memory_space<vmem>>, vector<1x1x20x20xf32>
    %66 = vector.shape_cast %65 : vector<1x1x20x20xf32> to vector<20x20xf32>
    %67 = vector.shape_cast %64 : vector<20x20xf32> to vector<1x1x20x20xf32>
    tpu.vector_store %arg6[%c0_33, %c0_34, %c0_35, %c0_36], %67 {strides = array<i32>} : memref<1x3x20x20xf32, #tpu.memory_space<vmem>>, vector<1x1x20x20xf32>,
    %c1_37 = arith.constant 1 : index
    %c0_38 = arith.constant 0 : index
    %68 = memref.load %arg3[%c1_37, %c0_38] : memref<3x2xf32, #tpu.memory_space<smem>>
    %69 = vector.broadcast %68 : f32 to vector<20x20xf32>
    %70 = arith.mulf %69, %36 : vector<20x20xf32>
    %c1_39 = arith.constant 1 : index
    %c1_40 = arith.constant 1 : index
    %71 = memref.load %arg3[%c1_39, %c1_40] : memref<3x2xf32, #tpu.memory_space<smem>>
    %72 = vector.broadcast %71 : f32 to vector<20x20xf32>
    %73 = arith.mulf %72, %54 : vector<20x20xf32>
    %74 = arith.addf %70, %73 : vector<20x20xf32>
    %c1_41 = arith.constant 1 : index
    %75 = memref.load %arg4[%c1_41] : memref<3xf32, #tpu.memory_space<smem>>
    %76 = vector.broadcast %75 : f32 to vector<20x20xf32>
    %77 = arith.addf %74, %76 : vector<20x20xf32>
    %c0_42 = arith.constant 0 : index
    %c1_43 = arith.constant 1 : index
    %c0_44 = arith.constant 0 : index
    %c0_45 = arith.constant 0 : index
    %78 = vector.load %arg6[%c0_42, %c1_43, %c0_44, %c0_45] : memref<1x3x20x20xf32, #tpu.memory_space<vmem>>, vector<1x1x20x20xf32>
    %79 = vector.shape_cast %78 : vector<1x1x20x20xf32> to vector<20x20xf32>
    %80 = vector.shape_cast %77 : vector<20x20xf32> to vector<1x1x20x20xf32>
    tpu.vector_store %arg6[%c0_42, %c1_43, %c0_44, %c0_45], %80 {strides = array<i32>} : memref<1x3x20x20xf32, #tpu.memory_space<vmem>>, vector<1x1x20x20xf32>,
    %c2_46 = arith.constant 2 : index
    %c0_47 = arith.constant 0 : index
    %81 = memref.load %arg3[%c2_46, %c0_47] : memref<3x2xf32, #tpu.memory_space<smem>>
    %82 = vector.broadcast %81 : f32 to vector<20x20xf32>
    %83 = arith.mulf %82, %36 : vector<20x20xf32>
    %c2_48 = arith.constant 2 : index
    %c1_49 = arith.constant 1 : index
    %84 = memref.load %arg3[%c2_48, %c1_49] : memref<3x2xf32, #tpu.memory_space<smem>>
    %85 = vector.broadcast %84 : f32 to vector<20x20xf32>
    %86 = arith.mulf %85, %54 : vector<20x20xf32>
    %87 = arith.addf %83, %86 : vector<20x20xf32>
    %c2_50 = arith.constant 2 : index
    %88 = memref.load %arg4[%c2_50] : memref<3xf32, #tpu.memory_space<smem>>
    %89 = vector.broadcast %88 : f32 to vector<20x20xf32>
    %90 = arith.addf %87, %89 : vector<20x20xf32>
    %c0_51 = arith.constant 0 : index
    %c2_52 = arith.constant 2 : index
    %c0_53 = arith.constant 0 : index
    %c0_54 = arith.constant 0 : index
    %91 = vector.load %arg6[%c0_51, %c2_52, %c0_53, %c0_54] : memref<1x3x20x20xf32, #tpu.memory_space<vmem>>, vector<1x1x20x20xf32>
    %92 = vector.shape_cast %91 : vector<1x1x20x20xf32> to vector<20x20xf32>
    %93 = vector.shape_cast %90 : vector<20x20xf32> to vector<1x1x20x20xf32>
    tpu.vector_store %arg6[%c0_51, %c2_52, %c0_53, %c0_54], %93 {strides = array<i32>} : memref<1x3x20x20xf32, #tpu.memory_space<vmem>>, vector<1x1x20x20xf32>,
    return
  }
  func.func @transform_0(%arg0: i32) -> (i32, i32) {
    %c0_i32 = arith.constant 0 : i32
    %c0_i32_0 = arith.constant 0 : i32
    %c0_i32_1 = arith.constant 0 : i32
    return %c0_i32, %c0_i32_0 : i32, i32
  }
  func.func @transform_1(%arg0: i32) -> i32 {
    %c0_i32 = arith.constant 0 : i32
    %c0_i32_0 = arith.constant 0 : i32
    return %c0_i32 : i32
  }
  func.func @transform_2(%arg0: i32) -> (i32, i32) {
    %c0_i32 = arith.constant 0 : i32
    %c0_i32_0 = arith.constant 0 : i32
    %c0_i32_1 = arith.constant 0 : i32
    return %c0_i32, %c0_i32_0 : i32, i32
  }
  func.func @transform_3(%arg0: i32) -> i32 {
    %c0_i32 = arith.constant 0 : i32
    %c0_i32_0 = arith.constant 0 : i32
    return %c0_i32 : i32
  }
  func.func @transform_4(%arg0: i32) -> (i32, i32, i32, i32) {
    %c0_i32 = arith.constant 0 : i32
    %c0_i32_0 = arith.constant 0 : i32
    %c0_i32_1 = arith.constant 0 : i32
    %c0_i32_2 = arith.constant 0 : i32
    return %arg0, %c0_i32, %c0_i32_0, %c0_i32_1 : i32, i32, i32, i32
  }
  func.func @transform_5(%arg0: i32) -> (i32, i32, i32, i32) {
    %c0_i32 = arith.constant 0 : i32
    %c0_i32_0 = arith.constant 0 : i32
    %c0_i32_1 = arith.constant 0 : i32
    %c0_i32_2 = arith.constant 0 : i32
    return %arg0, %c0_i32, %c0_i32_0, %c0_i32_1 : i32, i32, i32, i32
  }
}

</mosaic_0001>

<llo_original>
// kernel: forward.1
$region0: #{forward.1}
  #allocation0 [shape = 'u32[]', space=smem, size = 0x4, offset = 0x4, fixed_abs, tag = 'smem constant byte address 0x4 - core index']
  #allocation1 [shape = 'u32[144,128]{1,0:T(1,128)}', space=vmem, size = 0x12000, scoped, tag = 'internal scratch']
  %s0 = inlined_call_operand.vmem [shape: f32[2,3], index: 0, kind: input, shape index: {}]
  %s1 = inlined_call_operand.vmem [shape: f32[2], index: 1, kind: input, shape index: {}]
  %s2 = inlined_call_operand.vmem [shape: f32[3,2], index: 2, kind: input, shape index: {}]
  %s3 = inlined_call_operand.vmem [shape: f32[3], index: 3, kind: input, shape index: {}]
  %s4 = inlined_call_operand.vmem [shape: f32[2,3,20,20], index: 4, kind: input, shape index: {}]
  %s5 = inlined_call_operand.vmem [shape: f32[2,3,20,20], index: 5, kind: output, shape index: {}]
  %s6 = sld [smem:[#allocation0]]
  $region69: #{forward.1} parent=0
    _
  %s8 = ssub.s32 1, %s6
  %s9 = scalar_select 0, %s8, %s6
  $region1: #{forward.1} parent=0
    #allocation2 [shape = 'u8[1024]{0}', space=smem, size = 0x400, scoped, tag = 'input window, operand 0, single buffered']
    #allocation3 [shape = 's32[2]{0}', space=sflag, size = 0x8, scoped, tag = 'scoped memory for forward.1']
    #allocation4 [shape = 'u8[512]{0}', space=smem, size = 0x200, scoped, tag = 'input window, operand 1, single buffered']
    #allocation5 [shape = 's32[1]{0}', space=sflag, size = 0x4, scoped, tag = 'scoped memory for forward.1']
    #allocation6 [shape = 'u8[2048]{0}', space=smem, size = 0x800, scoped, tag = 'input window, operand 2, single buffered']
    #allocation7 [shape = 'u8[512]{0}', space=smem, size = 0x200, scoped, tag = 'input window, operand 3, single buffered']
    #allocation8 [shape = 's32[1]{0}', space=sflag, size = 0x4, scoped, tag = 'scoped memory for forward.1']
    %10 = vsyncpa [#allocation3], 0
    %11 = vsyncpa [#allocation5], 0
    %12 = vsyncpa [#allocation8], 0
    loop: start=0, step=1, limit=4
    $region2: #{forward.1} parent=1 // loop_pre_header
      _
    $region3: #{forward.1} parent=1 // loop_header
      %s14 = sphi 0, %s18
      %p15 = scmp.ge.s32.totalorder %s14, 4
      %s22 = sphi 0, %s22
      %s24 = sphi 0, %s22
      %s25 = sphi 0, %s24
      %s39 = sphi 0, %s25
      %s43 = sphi 0, %s43
      %s45 = sphi 0, %s43
      %s46 = sphi 0, %s45
      %s60 = sphi 0, %s46
      %s64 = sphi 0, %s64
      %s66 = sphi 0, %s64
      %s67 = sphi 0, %s66
      %s81 = sphi 0, %s67
      %s85 = sphi 0, %s85
      %s87 = sphi 0, %s85
      %s88 = sphi 0, %s87
      %s102 = sphi 0, %s88
      %s108 = sphi 0, %s110
      %s111 = sphi 0, %s108
      %s112 = sphi 0, %s111
      %s128 = sphi 0, %s112
      %s134 = sphi 0, %s136
      %s137 = sphi 0, %s134
      %s138 = sphi 0, %s137
      %s154 = sphi 0, %s138
    $region4: #{forward.1} parent=1 // loop_header_branch
      %17 = sbr.rel (%p15) target = $region8
    $region5: #{forward.1} parent=1 // loop_body
      %s19 = ssub.s32 %s14, 1
      %s20 = ssub.s32 %s14, 2
      %s21 = sadd.s32 %s14, 1
      %s23 = sadd.s32 %s22, 1
      %p26 = scmp.eq.s32.totalorder %s14, 1
      %p27 = scmp.ne.s32.totalorder %s22, %s24
      %p28 = scmp.eq.s32.totalorder %s14, 0
      %p29 = por %p27, %p28
      %p30 = scmp.ne.s32.totalorder %s22, %s24
      %p31 = scmp.eq.s32.totalorder %s19, 1
      %p32 = por %p30, %p31
      %p33 = scmp.ne.s32.totalorder %s24, %s25
      %p34 = scmp.eq.s32.totalorder %s19, 0
      %p35 = por %p33, %p34
      %p36 = scmp.ne.s32.totalorder %s24, %s25
      %p37 = scmp.eq.s32.totalorder %s20, 1
      %p38 = por %p36, %p37
      %p40 = scmp.ne.s32.totalorder %s25, %s39
      %p41 = scmp.eq.s32.totalorder %s20, 0
      %p42 = por %p40, %p41
      %s44 = sadd.s32 %s43, 1
      %p47 = scmp.eq.s32.totalorder %s14, 1
      %p48 = scmp.ne.s32.totalorder %s43, %s45
      %p49 = scmp.eq.s32.totalorder %s14, 0
      %p50 = por %p48, %p49
      %p51 = scmp.ne.s32.totalorder %s43, %s45
      %p52 = scmp.eq.s32.totalorder %s19, 1
      %p53 = por %p51, %p52
      %p54 = scmp.ne.s32.totalorder %s45, %s46
      %p55 = scmp.eq.s32.totalorder %s19, 0
      %p56 = por %p54, %p55
      %p57 = scmp.ne.s32.totalorder %s45, %s46
      %p58 = scmp.eq.s32.totalorder %s20, 1
      %p59 = por %p57, %p58
      %p61 = scmp.ne.s32.totalorder %s46, %s60
      %p62 = scmp.eq.s32.totalorder %s20, 0
      %p63 = por %p61, %p62
      %s65 = sadd.s32 %s64, 1
      %p68 = scmp.eq.s32.totalorder %s14, 1
      %p69 = scmp.ne.s32.totalorder %s64, %s66
      %p70 = scmp.eq.s32.totalorder %s14, 0
      %p71 = por %p69, %p70
      %p72 = scmp.ne.s32.totalorder %s64, %s66
      %p73 = scmp.eq.s32.totalorder %s19, 1
      %p74 = por %p72, %p73
      %p75 = scmp.ne.s32.totalorder %s66, %s67
      %p76 = scmp.eq.s32.totalorder %s19, 0
      %p77 = por %p75, %p76
      %p78 = scmp.ne.s32.totalorder %s66, %s67
      %p79 = scmp.eq.s32.totalorder %s20, 1
      %p80 = por %p78, %p79
      %p82 = scmp.ne.s32.totalorder %s67, %s81
      %p83 = scmp.eq.s32.totalorder %s20, 0
      %p84 = por %p82, %p83
      %s86 = sadd.s32 %s85, 1
      %p89 = scmp.eq.s32.totalorder %s14, 1
      %p90 = scmp.ne.s32.totalorder %s85, %s87
      %p91 = scmp.eq.s32.totalorder %s14, 0
      %p92 = por %p90, %p91
      %p93 = scmp.ne.s32.totalorder %s85, %s87
      %p94 = scmp.eq.s32.totalorder %s19, 1
      %p95 = por %p93, %p94
      %p96 = scmp.ne.s32.totalorder %s87, %s88
      %p97 = scmp.eq.s32.totalorder %s19, 0
      %p98 = por %p96, %p97
      %p99 = scmp.ne.s32.totalorder %s87, %s88
      %p100 = scmp.eq.s32.totalorder %s20, 1
      %p101 = por %p99, %p100
      %p103 = scmp.ne.s32.totalorder %s88, %s102
      %p104 = scmp.eq.s32.totalorder %s20, 0
      %p105 = por %p103, %p104
      %s106 = ssub.s32 %s14, %s21
      %p107 = scmp.eq.s32.totalorder %s106, 0
      %s109 = sadd.s32 %s108, 1
      %s110 = scalar_select %p107, %s108, %s109
      %p113 = pneg %p107
      %p114 = scmp.eq.s32.totalorder %s14, 1
      %p115 = por %p113, %p114
      %p116 = scmp.ne.s32.totalorder %s108, %s111
      %p117 = scmp.eq.s32.totalorder %s14, 0
      %p118 = por %p116, %p117
      %p119 = scmp.ne.s32.totalorder %s108, %s111
      %p120 = scmp.eq.s32.totalorder %s19, 1
      %p121 = por %p119, %p120
      %p122 = scmp.ne.s32.totalorder %s111, %s112
      %p123 = scmp.eq.s32.totalorder %s19, 0
      %p124 = por %p122, %p123
      %p125 = scmp.ne.s32.totalorder %s111, %s112
      %p126 = scmp.eq.s32.totalorder %s20, 1
      %p127 = por %p125, %p126
      %p129 = scmp.ne.s32.totalorder %s112, %s128
      %p130 = scmp.eq.s32.totalorder %s20, 0
      %p131 = por %p129, %p130
      %s132 = ssub.s32 %s14, %s21
      %p133 = scmp.eq.s32.totalorder %s132, 0
      %s135 = sadd.s32 %s134, 1
      %s136 = scalar_select %p133, %s134, %s135
      %p139 = pneg %p133
      %p140 = scmp.eq.s32.totalorder %s14, 1
      %p141 = por %p139, %p140
      %p142 = scmp.ne.s32.totalorder %s134, %s137
      %p143 = scmp.eq.s32.totalorder %s14, 0
      %p144 = por %p142, %p143
      %p145 = scmp.ne.s32.totalorder %s134, %s137
      %p146 = scmp.eq.s32.totalorder %s19, 1
      %p147 = por %p145, %p146
      %p148 = scmp.ne.s32.totalorder %s137, %s138
      %p149 = scmp.eq.s32.totalorder %s19, 0
      %p150 = por %p148, %p149
      %p151 = scmp.ne.s32.totalorder %s137, %s138
      %p152 = scmp.eq.s32.totalorder %s20, 1
      %p153 = por %p151, %p152
      %p155 = scmp.ne.s32.totalorder %s138, %s154
      %p156 = scmp.eq.s32.totalorder %s20, 0
      %p157 = por %p155, %p156
      %p158 = scmp.le.s32.totalorder 1, %s14
      %p159 = scmp.lt.s32.totalorder %s14, 3
      %p160 = pnand %p158, %p159
      %p161 = pneg %p160
      // Predicated region
      $region9: #{forward.1} parent=5 // pred_check
        _
      $region10: #{forward.1} parent=5 // pred_check_branch
        %163 = sbr.rel (%p160) target = $region12
      $region11: #{forward.1} parent=5 // pred_region
        %s164 = ssub.s32 %s14, 1
        // Predicated region
        $region13: #{forward.1} parent=11 // pred_check
          %p165 = pneg %p35
        $region14: #{forward.1} parent=11 // pred_check_branch
          %167 = sbr.rel (%p165) target = $region16
        $region15: #{forward.1} parent=11 // pred_region
          %s169 = ssub.s32 32, 32
          %170 = vsyncadd [#allocation3], %s169
          %s172 = sshll.u32 %s0, 4
          %s173 = int_to_ptr.vmem [resolvable:$true] %s172
          %175 = dma.vmem_to_smem %s173, 32, [#allocation2], [#allocation3]
        $region16: #{forward.1} parent=11 // pred_fallthru
          _
        // Predicated region
        $region17: #{forward.1} parent=11 // pred_check
          %p176 = pneg %p56
        $region18: #{forward.1} parent=11 // pred_check_branch
          %178 = sbr.rel (%p176) target = $region20
        $region19: #{forward.1} parent=11 // pred_region
          %s180 = ssub.s32 16, 16
          %181 = vsyncadd [#allocation5], %s180
          %s183 = sshll.u32 %s1, 4
          %s184 = int_to_ptr.vmem [resolvable:$true] %s183
          %186 = dma.vmem_to_smem %s184, 16, [#allocation4], [#allocation5]
        $region20: #{forward.1} parent=11 // pred_fallthru
          _
        // Predicated region
        $region21: #{forward.1} parent=11 // pred_check
          %p187 = pneg %p77
        $region22: #{forward.1} parent=11 // pred_check_branch
          %189 = sbr.rel (%p187) target = $region24
        $region23: #{forward.1} parent=11 // pred_region
          %s191 = ssub.s32 64, 64
          %192 = vsyncadd [#allocation5], %s191
          %s194 = sshll.u32 %s2, 4
          %s195 = int_to_ptr.vmem [resolvable:$true] %s194
          %197 = dma.vmem_to_smem %s195, 64, [#allocation6], [#allocation5]
        $region24: #{forward.1} parent=11 // pred_fallthru
          _
        // Predicated region
        $region25: #{forward.1} parent=11 // pred_check
          %p198 = pneg %p98
        $region26: #{forward.1} parent=11 // pred_check_branch
          %200 = sbr.rel (%p198) target = $region28
        $region27: #{forward.1} parent=11 // pred_region
          %s202 = ssub.s32 16, 16
          %203 = vsyncadd [#allocation8], %s202
          %s205 = sshll.u32 %s3, 4
          %s206 = int_to_ptr.vmem [resolvable:$true] %s205
          %208 = dma.vmem_to_smem %s206, 16, [#allocation7], [#allocation8]
        $region28: #{forward.1} parent=11 // pred_fallthru
          _
      $region12: #{forward.1} parent=5 // pred_fallthru
        _
      %p209 = scmp.lt.s32.totalorder %s14, 2
      // Predicated region
      $region29: #{forward.1} parent=5 // pred_check
        %p210 = pneg %p209
      $region30: #{forward.1} parent=5 // pred_check_branch
        %212 = sbr.rel (%p210) target = $region32
      $region31: #{forward.1} parent=5 // pred_region
        // Predicated region
        $region33: #{forward.1} parent=31 // pred_check
          %p213 = pneg %p118
        $region34: #{forward.1} parent=31 // pred_check_branch
          %215 = sbr.rel (%p213) target = $region36
        $region35: #{forward.1} parent=31 // pred_region
          %p216 = scmp.lt.s32.totalorder %s14, 1
          %s217 = scalar_select %p216, %s14, 1
          %s218 = smul.addr %s217, 9
          %s219 = smul.addr %s218, 8
          %s220 = scalar_lea.vmem %s4, %s219
        $region36: #{forward.1} parent=31 // pred_fallthru
          _
      $region32: #{forward.1} parent=5 // pred_fallthru
        _
      %p221 = scmp.le.s32.totalorder 1, %s14
      %p222 = scmp.lt.s32.totalorder %s14, 3
      %p223 = pnand %p221, %p222
      %p224 = pneg %p223
      // Predicated region
      $region37: #{forward.1} parent=5 // pred_check
        _
      $region38: #{forward.1} parent=5 // pred_check_branch
        %226 = sbr.rel (%p223) target = $region40
      $region39: #{forward.1} parent=5 // pred_region
        %s227 = ssub.s32 %s14, 1
        // Predicated region
        $region41: #{forward.1} parent=39 // pred_check
          %p228 = pneg %p35
        $region42: #{forward.1} parent=39 // pred_check_branch
          %230 = sbr.rel (%p228) target = $region44
        $region43: #{forward.1} parent=39 // pred_region
          %231 = dma.done [#allocation3], 32
        $region44: #{forward.1} parent=39 // pred_fallthru
          _
        // Predicated region
        $region45: #{forward.1} parent=39 // pred_check
          %p232 = pneg %p56
        $region46: #{forward.1} parent=39 // pred_check_branch
          %234 = sbr.rel (%p232) target = $region48
        $region47: #{forward.1} parent=39 // pred_region
          %235 = dma.done [#allocation5], 16
        $region48: #{forward.1} parent=39 // pred_fallthru
          _
        // Predicated region
        $region49: #{forward.1} parent=39 // pred_check
          %p236 = pneg %p77
        $region50: #{forward.1} parent=39 // pred_check_branch
          %238 = sbr.rel (%p236) target = $region52
        $region51: #{forward.1} parent=39 // pred_region
          %239 = dma.done [#allocation5], 64
        $region52: #{forward.1} parent=39 // pred_fallthru
          _
        // Predicated region
        $region53: #{forward.1} parent=39 // pred_check
          %p240 = pneg %p98
        $region54: #{forward.1} parent=39 // pred_check_branch
          %242 = sbr.rel (%p240) target = $region56
        $region55: #{forward.1} parent=39 // pred_region
          %243 = dma.done [#allocation8], 16
        $region56: #{forward.1} parent=39 // pred_fallthru
          _
        %244 = sfence
        %p245 = pneg %p35
        %p246 = pneg %p32
        %p247 = pneg %p56
        %p248 = pneg %p53
        %p249 = pneg %p77
        %p250 = pneg %p74
        %p251 = pneg %p98
        %p252 = pneg %p95
        %p253 = scmp.lt.s32.totalorder %s19, 1
        %s254 = scalar_select %p253, %s19, 1
        %s255 = smul.addr %s254, 9
        %s256 = smul.addr %s255, 8
        %s257 = scalar_lea.vmem %s4, %s256
        %p258 = pneg %p124
        %p259 = pneg %p121
        %p260 = pneg %p150
        %p261 = pneg %p147
        %p262 = scmp.lt.s32.totalorder %s19, 1
        %s263 = scalar_select %p262, %s19, 1
        %s264 = smul.addr %s263, 9
        %s265 = smul.addr %s264, 8
        %s266 = scalar_lea.vmem %s5, %s265
        %p267 = scmp.lt.s32.totalorder %s19, 1
        %s268 = scalar_select %p267, %s19, 1
        %s269 = smul.addr %s268, 9
        %s270 = smul.addr %s269, 8
        %s271 = scalar_lea.vmem %s4, %s270
        %p272 = scmp.lt.s32.totalorder %s19, 1
        %s273 = scalar_select %p272, %s19, 1
        %s274 = smul.addr %s273, 9
        %s275 = smul.addr %s274, 8
        %s276 = scalar_lea.vmem %s5, %s275
        %v277 = vlaneseq
        %v278 = vshrl.u32 %v277, 7
        %v279 = vadd.s32 %v278, 8
        %v280 = vadd.s32 %v278, 16
        %v281 = vlaneseq
        %v282 = vand.u32 %v281, 127
        %vm283 = vcmp.ge.s32.totalorder %v278, 2
        %vm284 = vcmp.ge.s32.totalorder %v279, 2
        %vm285 = vcmp.ge.s32.totalorder %v280, 2
        %vm286 = vcmp.lt.s32.totalorder %v278, 18
        %vm287 = vcmp.lt.s32.totalorder %v279, 18
        %vm288 = vcmp.lt.s32.totalorder %v280, 18
        %vm289 = vmand %vm283, %vm286
        %vm290 = vmand %vm284, %vm287
        %vm291 = vmand %vm285, %vm288
        %vm292 = vcmp.ge.s32.totalorder %v282, 2
        %vm293 = vmand %vm289, %vm292
        %vm294 = vmand %vm290, %vm292
        %vm295 = vmand %vm291, %vm292
        %vm296 = vcmp.lt.s32.totalorder %v282, 18
        %vm297 = vmand %vm293, %vm296
        %vm298 = vmand %vm294, %vm296
        %vm299 = vmand %vm295, %vm296
        %v300 = vld [vmem:[%s271] sm:$0xff]
        %v301 = vld [vmem:[%s271 + $0x8] sm:$0xff]
        %v302 = vld [vmem:[%s271 + $0x10] sm:$0xf]
        %s303 = scalar_lea.vmem %s271, 24
        %v304 = vld [vmem:[%s303] sm:$0xff]
        %v305 = vld [vmem:[%s303 + $0x8] sm:$0xff]
        %v306 = vld [vmem:[%s303 + $0x10] sm:$0xf]
        %s307 = scalar_lea.vmem %s271, 48
        %v308 = vld [vmem:[%s307] sm:$0xff]
        %v309 = vld [vmem:[%s307 + $0x8] sm:$0xff]
        %v310 = vld [vmem:[%s307 + $0x10] sm:$0xf]
        %s311 = sld [smem:[#allocation2]]
        %v312 = vstv %s311
        %v313 = vmul.f32 %v312, %v300
        %v314 = vmul.f32 %v312, %v301
        %v315 = vmul.f32 %v312, %v302
        %s316 = sld [smem:[#allocation2 + $0x1]]
        %v317 = vstv %s316
        %v318 = vmul.f32 %v317, %v304
        %v319 = vmul.f32 %v317, %v305
        %v320 = vmul.f32 %v317, %v306
        %v321 = vadd.f32 %v313, %v318
        %v322 = vadd.f32 %v314, %v319
        %v323 = vadd.f32 %v315, %v320
        %s324 = sld [smem:[#allocation2 + $0x2]]
        %v325 = vstv %s324
        %v326 = vmul.f32 %v325, %v308
        %v327 = vmul.f32 %v325, %v309
        %v328 = vmul.f32 %v325, %v310
        %v329 = vadd.f32 %v321, %v326
        %v330 = vadd.f32 %v322, %v327
        %v331 = vadd.f32 %v323, %v328
        %s332 = sld [smem:[#allocation4]]
        %v333 = vstv %s332
        %v334 = vadd.f32 %v329, %v333
        %v335 = vadd.f32 %v330, %v333
        %v336 = vadd.f32 %v331, %v333
        %v337 = vmax.f32 %v334, 0.0
        %v338 = vmax.f32 %v335, 0.0
        %v339 = vmax.f32 %v336, 0.0
        %v340 = vsel %vm297, %v337, 0.0
        %v341 = vsel %vm298, %v338, 0.0
        %v342 = vsel %vm299, %v339, 0.0
        %s343 = sld [smem:[#allocation2 + $0x80]]
        %v344 = vstv %s343
        %v345 = vmul.f32 %v344, %v300
        %v346 = vmul.f32 %v344, %v301
        %v347 = vmul.f32 %v344, %v302
        %s348 = sld [smem:[#allocation2 + $0x81]]
        %v349 = vstv %s348
        %v350 = vmul.f32 %v349, %v304
        %v351 = vmul.f32 %v349, %v305
        %v352 = vmul.f32 %v349, %v306
        %v353 = vadd.f32 %v345, %v350
        %v354 = vadd.f32 %v346, %v351
        %v355 = vadd.f32 %v347, %v352
        %s356 = sld [smem:[#allocation2 + $0x82]]
        %v357 = vstv %s356
        %v358 = vmul.f32 %v357, %v308
        %v359 = vmul.f32 %v357, %v309
        %v360 = vmul.f32 %v357, %v310
        %v361 = vadd.f32 %v353, %v358
        %v362 = vadd.f32 %v354, %v359
        %v363 = vadd.f32 %v355, %v360
        %s364 = sld [smem:[#allocation4 + $0x1]]
        %v365 = vstv %s364
        %v366 = vadd.f32 %v361, %v365
        %v367 = vadd.f32 %v362, %v365
        %v368 = vadd.f32 %v363, %v365
        %v369 = vmax.f32 %v366, 0.0
        %v370 = vmax.f32 %v367, 0.0
        %v371 = vmax.f32 %v368, 0.0
        %v372 = vsel %vm297, %v369, 0.0
        %v373 = vsel %vm298, %v370, 0.0
        %v374 = vsel %vm299, %v371, 0.0
        %s375 = sld [smem:[#allocation6]]
        %v376 = vstv %s375
        %v377 = vmul.f32 %v376, %v340
        %v378 = vmul.f32 %v376, %v341
        %v379 = vmul.f32 %v376, %v342
        %s380 = sld [smem:[#allocation6 + $0x1]]
        %v381 = vstv %s380
        %v382 = vmul.f32 %v381, %v372
        %v383 = vmul.f32 %v381, %v373
        %v384 = vmul.f32 %v381, %v374
        %v385 = vadd.f32 %v377, %v382
        %v386 = vadd.f32 %v378, %v383
        %v387 = vadd.f32 %v379, %v384
        %s388 = sld [smem:[#allocation7]]
        %v389 = vstv %s388
        %v390 = vadd.f32 %v385, %v389
        %v391 = vadd.f32 %v386, %v389
        %v392 = vadd.f32 %v387, %v389
        %vm393 = vcmask 162816
        %394 = vst.msk [vmem:[%s276] sm:$0xff] %vm393, %v390
        %395 = vst.msk [vmem:[%s276 + $0x8] sm:$0xff] %vm393, %v391
        %vm396 = vcmask 158720
        %397 = vst.msk [vmem:[%s276 + $0x10] sm:$0xf] %vm396, %v392
        %s398 = sld [smem:[#allocation6 + $0x80]]
        %v399 = vstv %s398
        %v400 = vmul.f32 %v399, %v340
        %v401 = vmul.f32 %v399, %v341
        %v402 = vmul.f32 %v399, %v342
        %s403 = sld [smem:[#allocation6 + $0x81]]
        %v404 = vstv %s403
        %v405 = vmul.f32 %v404, %v372
        %v406 = vmul.f32 %v404, %v373
        %v407 = vmul.f32 %v404, %v374
        %v408 = vadd.f32 %v400, %v405
        %v409 = vadd.f32 %v401, %v406
        %v410 = vadd.f32 %v402, %v407
        %s411 = sld [smem:[#allocation7 + $0x1]]
        %v412 = vstv %s411
        %v413 = vadd.f32 %v408, %v412
        %v414 = vadd.f32 %v409, %v412
        %v415 = vadd.f32 %v410, %v412
        %s416 = scalar_lea.vmem %s276, 24
        %417 = vst.msk [vmem:[%s416] sm:$0xff] %vm393, %v413
        %418 = vst.msk [vmem:[%s416 + $0x8] sm:$0xff] %vm393, %v414
        %419 = vst.msk [vmem:[%s416 + $0x10] sm:$0xf] %vm396, %v415
        %s420 = sld [smem:[#allocation6 + $0x100]]
        %v421 = vstv %s420
        %v422 = vmul.f32 %v421, %v340
        %v423 = vmul.f32 %v421, %v341
        %v424 = vmul.f32 %v421, %v342
        %s425 = sld [smem:[#allocation6 + $0x101]]
        %v426 = vstv %s425
        %v427 = vmul.f32 %v426, %v372
        %v428 = vmul.f32 %v426, %v373
        %v429 = vmul.f32 %v426, %v374
        %v430 = vadd.f32 %v422, %v427
        %v431 = vadd.f32 %v423, %v428
        %v432 = vadd.f32 %v424, %v429
        %s433 = sld [smem:[#allocation7 + $0x2]]
        %v434 = vstv %s433
        %v435 = vadd.f32 %v430, %v434
        %v436 = vadd.f32 %v431, %v434
        %v437 = vadd.f32 %v432, %v434
        %s438 = scalar_lea.vmem %s276, 48
        %439 = vst.msk [vmem:[%s438] sm:$0xff] %vm393, %v435
        %440 = vst.msk [vmem:[%s438 + $0x8] sm:$0xff] %vm393, %v436
        %441 = vst.msk [vmem:[%s438 + $0x10] sm:$0xf] %vm396, %v437
        %p442 = scmp.lt.s32.totalorder %s19, 1
        %s443 = scalar_select %p442, %s19, 1
        %s444 = smul.addr %s443, 9
        %s445 = smul.addr %s444, 8
        %s446 = scalar_lea.vmem %s5, %s445
        // Predicated region
        $region57: #{forward.1} parent=39 // pred_check
          %p447 = pneg %p147
        $region58: #{forward.1} parent=39 // pred_check_branch
          %449 = sbr.rel (%p447) target = $region60
        $region59: #{forward.1} parent=39 // pred_region
          _
        $region60: #{forward.1} parent=39 // pred_fallthru
          _
      $region40: #{forward.1} parent=5 // pred_fallthru
        _
      %p450 = scmp.le.s32.totalorder 2, %s14
      // Predicated region
      $region61: #{forward.1} parent=5 // pred_check
        %p451 = pneg %p450
      $region62: #{forward.1} parent=5 // pred_check_branch
        %453 = sbr.rel (%p451) target = $region64
      $region63: #{forward.1} parent=5 // pred_region
        %s454 = ssub.s32 %s14, 2
        // Predicated region
        $region65: #{forward.1} parent=63 // pred_check
          %p455 = pneg %p153
        $region66: #{forward.1} parent=63 // pred_check_branch
          %457 = sbr.rel (%p455) target = $region68
        $region67: #{forward.1} parent=63 // pred_region
          %p458 = scmp.lt.s32.totalorder %s20, 1
          %s459 = scalar_select %p458, %s20, 1
          %s460 = smul.addr %s459, 9
          %s461 = smul.addr %s460, 8
          %s462 = scalar_lea.vmem %s5, %s461
        $region68: #{forward.1} parent=63 // pred_fallthru
          _
      $region64: #{forward.1} parent=5 // pred_fallthru
        _
    $region6: #{forward.1} parent=1 // loop_footer
      %s18 = sadd.s32 1, %s14
    $region7: #{forward.1} parent=1 // loop_footer_branch
      %13 = sbr.rel target = $region3
    $region8: #{forward.1} parent=1 // loop_exit
      _
    %463 = vsyncpa [#allocation3], 1
    %s464 = scalar_lea.sflag [#allocation3], 1
    %465 = vsyncpa %s464, 1
    %466 = vsyncpa [#allocation5], 1
    %467 = vsyncpa [#allocation8], 1

</llo_original>
